<compile_context>
chip_gen: v7x
topology: tpu7x:2x2x1
jax: 0.10.0
libtpu: 0.0.40
codegen_flags: <defaults>
</compile_context>

<pallas_src>
import functools
import math

import jax
import jax.numpy as jnp
from jax.experimental import pallas as pl
from jax.experimental.pallas import tpu as pltpu

_BN_EPS = 1e-3


# ----------------------------------------------------------------------------
# small helpers
# ----------------------------------------------------------------------------
def _round_up(x, m):
    return (x + m - 1) // m * m


def _tile(dim, max_tile, mult):
    """Pick (tile, padded_dim): tile is a multiple of `mult`, <= max_tile,
    and divides padded_dim. `max_tile` must itself be a multiple of `mult`."""
    if dim >= max_tile:
        return max_tile, _round_up(dim, max_tile)
    t = _round_up(dim, mult)
    return t, t


def _pad2(a, rows, cols):
    return jnp.pad(a, ((0, rows - a.shape[0]), (0, cols - a.shape[1])))


def _apply_act(y, act):
    # epilogue math in f32 (v5e VPU/EUP have no bf16)
    if act == "silu":
        return y * jax.nn.sigmoid(y)
    if act == "relu":
        return jnp.maximum(y, 0.0)
    if act == "sigmoid":
        return jax.nn.sigmoid(y)
    return y


# ----------------------------------------------------------------------------
# Pallas kernels
# ----------------------------------------------------------------------------
def _mm_kernel(x_ref, w_ref, b_ref, o_ref, acc_ref, *, act):
    # tiled matmul: x:(tm,tk) bf16, w:(tk,tn) bf16, b:(1,tn) f32
    k = pl.program_id(2)

    @pl.when(k == 0)
    def _():
        acc_ref[...] = jnp.zeros_like(acc_ref)

    acc_ref[...] += jnp.dot(x_ref[...], w_ref[...],
                            preferred_element_type=jnp.float32)

    @pl.when(k == pl.num_programs(2) - 1)
    def _():
        o_ref[...] = _apply_act(acc_ref[...] + b_ref[...], act).astype(o_ref.dtype)


def _proj_kernel(x_ref, s_ref, w_ref, b_ref, o_ref, acc_ref):
    # fused SE-scale + 1x1 project conv:  out = (x * s) @ w + b
    # x:(1,tm,tk) bf16, s:(1,1,tk) f32, w:(tk,tn) bf16, b:(1,tn) f32
    k = pl.program_id(3)

    @pl.when(k == 0)
    def _():
        acc_ref[...] = jnp.zeros_like(acc_ref)

    xs = (x_ref[0].astype(jnp.float32) * s_ref[0]).astype(jnp.bfloat16)
    acc_ref[...] += jnp.dot(xs, w_ref[...], preferred_element_type=jnp.float32)

    @pl.when(k == pl.num_programs(3) - 1)
    def _():
        o_ref[0] = (acc_ref[...] + b_ref[...]).astype(o_ref.dtype)


def _proj_res_kernel(x_ref, s_ref, w_ref, b_ref, r_ref, o_ref, acc_ref):
    # same as _proj_kernel + fused residual add in the epilogue
    k = pl.program_id(3)

    @pl.when(k == 0)
    def _():
        acc_ref[...] = jnp.zeros_like(acc_ref)

    xs = (x_ref[0].astype(jnp.float32) * s_ref[0]).astype(jnp.bfloat16)
    acc_ref[...] += jnp.dot(xs, w_ref[...], preferred_element_type=jnp.float32)

    @pl.when(k == pl.num_programs(3) - 1)
    def _():
        o_ref[0] = (acc_ref[...] + b_ref[...]
                    + r_ref[0].astype(jnp.float32)).astype(o_ref.dtype)


def _dwconv_kernel(p_ref, w_ref, b_ref, o_ref, *, taps, act):
    # depthwise conv: patches p:(taps, tm, tc) bf16, w:(taps, 1, tc) f32
    acc = p_ref[0].astype(jnp.float32) * w_ref[0]
    for t in range(1, taps):
        acc = acc + p_ref[t].astype(jnp.float32) * w_ref[t]
    o_ref[...] = _apply_act(acc + b_ref[...], act).astype(o_ref.dtype)


def _gap_kernel(x_ref, o_ref, *, inv_hw):
    # global average pool: x:(B, th, tc) bf16 -> o:(B, tc) f32, reduce over HW
    i = pl.program_id(1)

    @pl.when(i == 0)
    def _():
        o_ref[...] = jnp.zeros_like(o_ref)

    o_ref[...] += jnp.sum(x_ref[...].astype(jnp.float32), axis=1)

    @pl.when(i == pl.num_programs(1) - 1)
    def _():
        o_ref[...] = o_ref[...] * inv_hw


# ----------------------------------------------------------------------------
# Pallas call wrappers
# ----------------------------------------------------------------------------
def matmul_bias_act(x, w, b, act="none", out_dtype=jnp.bfloat16):
    m, kdim = x.shape
    n = w.shape[1]
    tm, mp = _tile(m, 256, 8)
    tn, np_ = _tile(n, 256, 128)
    tk, kp = _tile(kdim, 512, 128)

    xp = _pad2(x.astype(jnp.bfloat16), mp, kp)
    wp = _pad2(w.astype(jnp.bfloat16), kp, np_)
    bp = _pad2(b.reshape(1, n).astype(jnp.float32), 1, np_)

    out = pl.pallas_call(
        functools.partial(_mm_kernel, act=act),
        out_shape=jax.ShapeDtypeStruct((mp, np_), out_dtype),
        grid=(mp // tm, np_ // tn, kp // tk),
        in_specs=[
            pl.BlockSpec((tm, tk), lambda i, j, k: (i, k)),
            pl.BlockSpec((tk, tn), lambda i, j, k: (k, j)),
            pl.BlockSpec((1, tn), lambda i, j, k: (0, j)),
        ],
        out_specs=pl.BlockSpec((tm, tn), lambda i, j, k: (i, j)),
        scratch_shapes=[pltpu.VMEM((tm, tn), jnp.float32)],
        compiler_params=pltpu.CompilerParams(
            dimension_semantics=("parallel", "parallel", "arbitrary")),
    )(xp, wp, bp)
    return out[:m, :n]


def project_conv_fused(h, s, p, shortcut=None):
    """MBConv 1x1 project conv with fused SE scale and optional residual add.
    h: (B,H,W,Cexp) bf16, s: (B,Cexp) f32, shortcut: (B,H,W,Cout) bf16 or None."""
    w, bias = _fold_bn(p)
    B, H, W, cin = h.shape
    cout = w.shape[-1]
    hw = H * W
    tm, hwp = _tile(hw, 256, 8)
    tn, np_ = _tile(cout, 256, 128)
    tk, kp = _tile(cin, 512, 128)

    x3 = jnp.pad(h.reshape(B, hw, cin).astype(jnp.bfloat16),
                 ((0, 0), (0, hwp - hw), (0, kp - cin)))
    s3 = jnp.pad(s.reshape(B, 1, cin).astype(jnp.float32),
                 ((0, 0), (0, 0), (0, kp - cin)))
    wp = _pad2(w.reshape(cin, cout).astype(jnp.bfloat16), kp, np_)
    bp = _pad2(bias.reshape(1, cout).astype(jnp.float32), 1, np_)

    x_spec = pl.BlockSpec((1, tm, tk), lambda b, i, j, k: (b, i, k))
    s_spec = pl.BlockSpec((1, 1, tk), lambda b, i, j, k: (b, 0, k))
    w_spec = pl.BlockSpec((tk, tn), lambda b, i, j, k: (k, j))
    b_spec = pl.BlockSpec((1, tn), lambda b, i, j, k: (0, j))
    o_spec = pl.BlockSpec((1, tm, tn), lambda b, i, j, k: (b, i, j))

    if shortcut is not None:
        r3 = jnp.pad(shortcut.reshape(B, hw, cout).astype(jnp.bfloat16),
                     ((0, 0), (0, hwp - hw), (0, np_ - cout)))
        r_spec = pl.BlockSpec((1, tm, tn), lambda b, i, j, k: (b, i, j))
        kern, in_specs = _proj_res_kernel, [x_spec, s_spec, w_spec, b_spec, r_spec]
        args = (x3, s3, wp, bp, r3)
    else:
        kern, in_specs = _proj_kernel, [x_spec, s_spec, w_spec, b_spec]
        args = (x3, s3, wp, bp)

    out = pl.pallas_call(
        kern,
        out_shape=jax.ShapeDtypeStruct((B, hwp, np_), jnp.bfloat16),
        grid=(B, hwp // tm, np_ // tn, kp // tk),
        in_specs=in_specs,
        out_specs=o_spec,
        scratch_shapes=[pltpu.VMEM((tm, tn), jnp.float32)],
        compiler_params=pltpu.CompilerParams(
            dimension_semantics=("parallel", "parallel", "parallel", "arbitrary")),
    )(*args)
    return out[:, :hw, :cout].reshape(B, H, W, cout)


def dwconv_bn_act(x, p, stride, act="silu"):
    w, bias = _fold_bn(p)            # w: (kh, kw, C) f32
    kh, kw, c = w.shape
    B = x.shape[0]
    pad = (kh - 1) // 2
    cols, ho, wo = _im2col(x, kh, kw, stride, pad)
    m = B * ho * wo
    taps = kh * kw
    # TODO(synk): the tap stack still materializes kh*kw copies of the activation
    # in HBM; a halo-window manual-DMA kernel would remove that blowup entirely.
    patches = jnp.stack([cc.reshape(m, c) for cc in cols],
                        axis=0).astype(jnp.bfloat16)

    tm, mp = _tile(m, 512, 8)
    tc, cp = _tile(c, 256 if taps <= 9 else 128, 128)
    patches = jnp.pad(patches, ((0, 0), (0, mp - m), (0, cp - c)))
    wt = jnp.pad(w.reshape(taps, 1, c).astype(jnp.float32),
                 ((0, 0), (0, 0), (0, cp - c)))
    bp = jnp.pad(bias.reshape(1, c).astype(jnp.float32), ((0, 0), (0, cp - c)))

    out = pl.pallas_call(
        functools.partial(_dwconv_kernel, taps=taps, act=act),
        out_shape=jax.ShapeDtypeStruct((mp, cp), jnp.bfloat16),
        grid=(mp // tm, cp // tc),
        in_specs=[
            pl.BlockSpec((taps, tm, tc), lambda i, j: (0, i, j)),
            pl.BlockSpec((taps, 1, tc), lambda i, j: (0, 0, j)),
            pl.BlockSpec((1, tc), lambda i, j: (0, j)),
        ],
        out_specs=pl.BlockSpec((tm, tc), lambda i, j: (i, j)),
        compiler_params=pltpu.CompilerParams(
            dimension_semantics=("parallel", "parallel")),
    )(patches, wt, bp)
    return out[:m, :c].reshape(B, ho, wo, c)


def global_avg_pool(x4):
    # x4: (B, H, W, C) bf16 -> (B, C) f32
    B, H, W, c = x4.shape
    hw = H * W
    th, hwp = _tile(hw, 512, 8)
    tc, cp = _tile(c, 512, 128)
    x3 = jnp.pad(x4.reshape(B, hw, c).astype(jnp.bfloat16),
                 ((0, 0), (0, hwp - hw), (0, cp - c)))
    out = pl.pallas_call(
        functools.partial(_gap_kernel, inv_hw=1.0 / hw),
        out_shape=jax.ShapeDtypeStruct((B, cp), jnp.float32),
        grid=(cp // tc, hwp // th),
        in_specs=[pl.BlockSpec((B, th, tc), lambda j, i: (0, i, j))],
        out_specs=pl.BlockSpec((B, tc), lambda j, i: (0, j)),
        compiler_params=pltpu.CompilerParams(
            dimension_semantics=("parallel", "arbitrary")),
    )(x3)
    return out[:, :c]


# ----------------------------------------------------------------------------
# Glue: im2col, BN folding, blocks
# ----------------------------------------------------------------------------
def _im2col(x, kh, kw, stride, pad):
    n, h, w, c = x.shape
    xp = jnp.pad(x, ((0, 0), (pad, pad), (pad, pad), (0, 0)))
    ho = (h + 2 * pad - kh) // stride + 1
    wo = (w + 2 * pad - kw) // stride + 1
    cols = []
    for i in range(kh):
        for j in range(kw):
            cols.append(xp[:, i:i + stride * ho:stride,
                           j:j + stride * wo:stride, :])
    return cols, ho, wo


def _fold_bn(p):
    # eval-mode BatchNorm folded into the conv weights (exact at inference).
    scale = p["gamma"] / jnp.sqrt(p["var"] + _BN_EPS)
    return p["w"] * scale, p["beta"] - p["mean"] * scale


def conv_bn_act(x, p, stride, act):
    w, b = _fold_bn(p)
    kh, kw, cin, cout = w.shape
    B, H, W, _ = x.shape
    if kh == 1 and kw == 1 and stride == 1:
        y = matmul_bias_act(x.reshape(B * H * W, cin), w.reshape(cin, cout), b, act)
        return y.reshape(B, H, W, cout)
    # only the 3x3 stem (Cin=3) hits this im2col path -> blowup is negligible.
    pad = (kh - 1) // 2
    cols, ho, wo = _im2col(x, kh, kw, stride, pad)
    xm = jnp.concatenate([c.reshape(B * ho * wo, cin) for c in cols], axis=1)
    y = matmul_bias_act(xm, w.reshape(kh * kw * cin, cout), b, act)
    return y.reshape(B, ho, wo, cout)


def se_scales(x4, p):
    # Squeeze-Excitation: returns per-(batch, channel) scale in f32.
    pooled = global_avg_pool(x4)                                       # (B, C)
    s = matmul_bias_act(pooled, p["w1"], p["b1"], "silu", out_dtype=jnp.float32)
    s = matmul_bias_act(s, p["w2"], p["b2"], "sigmoid", out_dtype=jnp.float32)
    return s


def mbconv(x, p, cfg):
    h = x
    if "expand" in p:
        h = conv_bn_act(h, p["expand"], 1, "silu")
    h = dwconv_bn_act(h, p["dw"], cfg["stride"], "silu")
    s = se_scales(h, p["se"])
    # SE scale + project conv + (StochasticDepth==identity) residual, fused.
    shortcut = x if cfg["use_res"] else None
    return project_conv_fused(h, s, p["project"], shortcut)


# ----------------------------------------------------------------------------
# EfficientNet-B4 configuration & deterministic parameter construction
# ----------------------------------------------------------------------------
_B0_STAGES = [  # (expand_ratio, kernel, stride, in_ch, out_ch, num_layers)
    (1, 3, 1, 32, 16, 1),
    (6, 3, 2, 16, 24, 2),
    (6, 5, 2, 24, 40, 2),
    (6, 3, 2, 40, 80, 3),
    (6, 5, 1, 80, 112, 3),
    (6, 5, 2, 112, 192, 4),
    (6, 3, 1, 192, 320, 1),
]
WIDTH_MULT, DEPTH_MULT = 1.4, 1.8  # efficientnet_b4 scaling


def _make_divisible(v, divisor=8):
    new_v = max(divisor, int(v + divisor / 2) // divisor * divisor)
    if new_v < 0.9 * v:
        new_v += divisor
    return new_v


def _adj_c(c):
    return _make_divisible(c * WIDTH_MULT)


def _adj_d(d):
    return int(math.ceil(d * DEPTH_MULT))


class _Init:
    def __init__(self, key):
        self.key = key
        self.i = 0

    def __call__(self, shape, fan_in):
        k = jax.random.fold_in(self.key, self.i)
        self.i += 1
        return jax.random.normal(k, shape, jnp.float32) / math.sqrt(fan_in)


def _bn_identity(c):
    return dict(gamma=jnp.ones((c,), jnp.float32),
                beta=jnp.zeros((c,), jnp.float32),
                mean=jnp.zeros((c,), jnp.float32),
                var=jnp.ones((c,), jnp.float32))


def _conv_bn(init, kh, cin, cout):
    p = dict(w=init((kh, kh, cin, cout), kh * kh * cin))
    p.update(_bn_identity(cout))
    return p


def _dwconv_bn(init, kh, c):
    p = dict(w=init((kh, kh, c), kh * kh))
    p.update(_bn_identity(c))
    return p


def build_efficientnet_b4(key):
    init = _Init(key)
    params = {}
    stem_out = _adj_c(32)                            # 48
    params["stem"] = _conv_bn(init, 3, 3, stem_out)

    blocks_p, blocks_cfg = [], []
    for expand, k, stride, cin0, cout0, nl in _B0_STAGES:
        cin, cout, layers = _adj_c(cin0), _adj_c(cout0), _adj_d(nl)
        for li in range(layers):
            bin_ = cin if li == 0 else cout
            bstride = stride if li == 0 else 1
            expanded = bin_ * expand
            sq = max(1, bin_ // 4)
            bp = {}
            if expand != 1:
                bp["expand"] = _conv_bn(init, 1, bin_, expanded)
            bp["dw"] = _dwconv_bn(init, k, expanded)
            bp["se"] = dict(
                w1=init((expanded, sq), expanded),
                b1=jnp.zeros((sq,), jnp.float32),
                w2=init((sq, expanded), sq),
                b2=jnp.zeros((expanded,), jnp.float32))
            bp["project"] = _conv_bn(init, 1, expanded, cout)
            blocks_p.append(bp)
            blocks_cfg.append(dict(stride=bstride,
                                   use_res=(bstride == 1 and bin_ == cout)))
    params["blocks"] = blocks_p

    head_in = _adj_c(320)                            # 448
    head_out = 4 * head_in                           # 1792
    params["head"] = _conv_bn(init, 1, head_in, head_out)

    params["classifier"] = dict(
        w1=init((head_out, 500), head_out), b1=jnp.zeros((500,), jnp.float32),
        w2=init((500, 250), 500),           b2=jnp.zeros((250,), jnp.float32),
        w3=init((250, 1), 250),             b3=jnp.zeros((1,), jnp.float32))
    return params, blocks_cfg


# ----------------------------------------------------------------------------
# Forward pass (== Efficientnet.forward in eval mode)
# ----------------------------------------------------------------------------
def efficientnet_forward(image_nchw, params, blocks_cfg):
    # NCHW -> NHWC, activations carried in bf16 between layers.
    x = jnp.transpose(image_nchw, (0, 2, 3, 1)).astype(jnp.bfloat16)
    x = conv_bn_act(x, params["stem"], stride=2, act="silu")
    for bp, cfg in zip(params["blocks"], blocks_cfg):
        x = mbconv(x, bp, cfg)
    x = conv_bn_act(x, params["head"], stride=1, act="silu")
    feat = global_avg_pool(x)                               # (N, 1792) f32
    # classifier head: Dropout(p=0.4) is identity at inference time.
    cp = params["classifier"]
    h1 = matmul_bias_act(feat, cp["w1"], cp["b1"], "relu", out_dtype=jnp.float32)
    h2 = matmul_bias_act(h1, cp["w2"], cp["b2"], "none", out_dtype=jnp.float32)
    out = matmul_bias_act(h2, cp["w3"], cp["b3"], "none", out_dtype=jnp.float32)
    return out                                              # (N, 1)


if __name__ == "__main__":
    base = jax.random.PRNGKey(0)
    params, blocks_cfg = build_efficientnet_b4(jax.random.fold_in(base, 1))
    # Small input consistent with the module (NCHW RGB image).
    image = jax.random.normal(jax.random.fold_in(base, 0), (2, 3, 32, 32),
                              jnp.float32)
    out = efficientnet_forward(image, params, blocks_cfg)
    out = jax.block_until_ready(out)
    assert out.shape == (2, 1), out.shape
    assert bool(jnp.all(jnp.isfinite(out)))
    print("KERNEL_OK")
</pallas_src>

<mosaic_0001>
module attributes {stable_mosaic.version = 11 : i64} {
  func.func @_mm_kernel(%arg0: i32, %arg1: i32, %arg2: i32, %arg3: memref<256x128xbf16, #tpu.memory_space<vmem>>, %arg4: memref<128x128xbf16, #tpu.memory_space<vmem>>, %arg5: memref<1x128xf32, #tpu.memory_space<vmem>>, %arg6: memref<256x128xbf16, #tpu.memory_space<vmem>>, %arg7: memref<256x128xf32, #tpu.memory_space<vmem>>) attributes {dimension_semantics = [#tpu.dimension_semantics<parallel>, #tpu.dimension_semantics<parallel>, #tpu.dimension_semantics<arbitrary>], iteration_bounds = array<i64: 2, 1, 1>, scalar_prefetch = 0 : i64, scratch_operands = 1 : i64, tpu.core_type = #tpu.core_type<tc>, window_params = [{transform_indices = @transform_0, window_bounds = array<i64: 256, 128>}, {transform_indices = @transform_1, window_bounds = array<i64: 128, 128>}, {transform_indices = @transform_2, window_bounds = array<i64: 1, 128>}, {transform_indices = @transform_3, window_bounds = array<i64: 256, 128>}]} {
    %c0_i32 = arith.constant 0 : i32
    %0 = arith.cmpi eq, %arg2, %c0_i32 : i32
    %1 = arith.extui %0 : i1 to i32
    %c0_i32_0 = arith.constant 0 : i32
    %2 = arith.cmpi ne, %1, %c0_i32_0 : i32
    scf.if %2 {
      %cst_10 = arith.constant 0.000000e+00 : f32
      %12 = vector.broadcast %cst_10 : f32 to vector<256x128xf32>
      %c0_11 = arith.constant 0 : index
      %c0_12 = arith.constant 0 : index
      %13 = vector.load %arg7[%c0_11, %c0_12] : memref<256x128xf32, #tpu.memory_space<vmem>>, vector<256x128xf32>
      tpu.vector_store %arg7[%c0_11, %c0_12], %12 {strides = array<i32>} : memref<256x128xf32, #tpu.memory_space<vmem>>, vector<256x128xf32>,
    } else {
    }
    %c0 = arith.constant 0 : index
    %c0_1 = arith.constant 0 : index
    %3 = vector.load %arg7[%c0, %c0_1] : memref<256x128xf32, #tpu.memory_space<vmem>>, vector<256x128xf32>
    %c0_2 = arith.constant 0 : index
    %c0_3 = arith.constant 0 : index
    %4 = vector.load %arg3[%c0_2, %c0_3] : memref<256x128xbf16, #tpu.memory_space<vmem>>, vector<256x128xbf16>
    %c0_4 = arith.constant 0 : index
    %c0_5 = arith.constant 0 : index
    %5 = vector.load %arg4[%c0_4, %c0_5] : memref<128x128xbf16, #tpu.memory_space<vmem>>, vector<128x128xbf16>
    %cst = arith.constant dense<0.000000e+00> : vector<256x128xf32>
    %6 = tpu.matmul %4, %5, %cst {dimension_numbers = #tpu.dot_dimension_numbers<[1], [0], [0], [1], [0, 0, 1, 1], [], []>} : vector<256x128xbf16>, vector<128x128xbf16>, vector<256x128xf32> -> vector<256x128xf32>
    %7 = arith.addf %3, %6 : vector<256x128xf32>
    %c0_6 = arith.constant 0 : index
    %c0_7 = arith.constant 0 : index
    %8 = vector.load %arg7[%c0_6, %c0_7] : memref<256x128xf32, #tpu.memory_space<vmem>>, vector<256x128xf32>
    tpu.vector_store %arg7[%c0_6, %c0_7], %7 {strides = array<i32>} : memref<256x128xf32, #tpu.memory_space<vmem>>, vector<256x128xf32>,
    %c0_i32_8 = arith.constant 0 : i32
    %9 = arith.cmpi eq, %arg2, %c0_i32_8 : i32
    %10 = arith.extui %9 : i1 to i32
    %c0_i32_9 = arith.constant 0 : i32
    %11 = arith.cmpi ne, %10, %c0_i32_9 : i32
    scf.if %11 {
      %c0_10 = arith.constant 0 : index
      %c0_11 = arith.constant 0 : index
      %12 = vector.load %arg7[%c0_10, %c0_11] : memref<256x128xf32, #tpu.memory_space<vmem>>, vector<256x128xf32>
      %c0_12 = arith.constant 0 : index
      %c0_13 = arith.constant 0 : index
      %13 = vector.load %arg5[%c0_12, %c0_13] : memref<1x128xf32, #tpu.memory_space<vmem>>, vector<1x128xf32>
      %14 = vector.broadcast %13 : vector<1x128xf32> to vector<256x128xf32>
      %15 = arith.addf %12, %14 : vector<256x128xf32>
      %16 = arith.negf %15 : vector<256x128xf32>
      %17 = math.exp %16 : vector<256x128xf32>
      %cst_14 = arith.constant 1.000000e+00 : f32
      %18 = vector.broadcast %cst_14 : f32 to vector<256x128xf32>
      %19 = arith.addf %18, %17 : vector<256x128xf32>
      %20 = arith.divf %18, %19 : vector<256x128xf32>
      %21 = arith.mulf %15, %20 : vector<256x128xf32>
      %22 = arith.truncf %21 : vector<256x128xf32> to vector<256x128xbf16>
      %c0_15 = arith.constant 0 : index
      %c0_16 = arith.constant 0 : index
      %23 = vector.load %arg6[%c0_15, %c0_16] : memref<256x128xbf16, #tpu.memory_space<vmem>>, vector<256x128xbf16>
      tpu.vector_store %arg6[%c0_15, %c0_16], %22 {strides = array<i32>} : memref<256x128xbf16, #tpu.memory_space<vmem>>, vector<256x128xbf16>,
    } else {
    }
    return
  }
  func.func @transform_0(%arg0: i32, %arg1: i32, %arg2: i32) -> (i32, i32) {
    %c0_i32 = arith.constant 0 : i32
    return %arg0, %arg2 : i32, i32
  }
  func.func @transform_1(%arg0: i32, %arg1: i32, %arg2: i32) -> (i32, i32) {
    %c0_i32 = arith.constant 0 : i32
    return %arg2, %arg1 : i32, i32
  }
  func.func @transform_2(%arg0: i32, %arg1: i32, %arg2: i32) -> (i32, i32) {
    %c0_i32 = arith.constant 0 : i32
    %c0_i32_0 = arith.constant 0 : i32
    return %c0_i32, %arg1 : i32, i32
  }
  func.func @transform_3(%arg0: i32, %arg1: i32, %arg2: i32) -> (i32, i32) {
    %c0_i32 = arith.constant 0 : i32
    return %arg0, %arg1 : i32, i32
  }
}

</mosaic_0001>

<llo_original>
// kernel: tpu_custom_call.1
$region0: #{tpu_custom_call.1}
  #allocation0 [shape = 'u32[]', space=smem, size = 0x4, offset = 0x4, fixed_abs, tag = 'smem constant byte address 0x4 - core index']
  #allocation1 [shape = 'u32[144,128]{1,0:T(1,128)}', space=vmem, size = 0x12000, scoped, tag = 'internal scratch']
  #allocation2 [shape = 'f32[256,128]{1,0:T(8,128)}', space=vmem, size = 0x20000, scoped, tag = 'scratch operand']
  %s0 = inlined_call_operand.hbm [shape: bf16[512,128], index: 0, kind: input, shape index: {}]
  %s1 = inlined_call_operand.hbm [shape: bf16[128,128], index: 1, kind: input, shape index: {}]
  %s2 = inlined_call_operand.vmem [shape: f32[1,128], index: 2, kind: input, shape index: {}]
  %s3 = inlined_call_operand.hbm [shape: bf16[512,128], index: 3, kind: output, shape index: {}]
  %s4 = sld [smem:[#allocation0]]
  $region61: #{tpu_custom_call.1} parent=0
    _
  %s6 = ssub.s32 1, %s4
  %s7 = scalar_select 0, %s6, %s4
  $region1: #{tpu_custom_call.1} parent=0
    #allocation3 [shape = 'u8[131072]{0}', space=vmem, size = 0x20000, scoped, tag = 'input window, operand 0']
    #allocation4 [shape = 's32[2]{0}', space=sflag, size = 0x8, scoped, tag = 'scoped memory for tpu_custom_call.1']
    #allocation5 [shape = 's32[2]{0}', space=sflag, size = 0x8, scoped, tag = 'scoped memory for tpu_custom_call.1']
    #allocation6 [shape = 'u8[32768]{0}', space=vmem, size = 0x8000, scoped, tag = 'input window, operand 1, single buffered']
    #allocation7 [shape = 's32[1]{0}', space=sflag, size = 0x4, scoped, tag = 'scoped memory for tpu_custom_call.1']
    #allocation8 [shape = 'u8[131072]{0}', space=vmem, size = 0x20000, scoped, tag = 'output window, operand 0']
    %8 = vsyncpa [#allocation4], 0
    %s9 = scalar_lea.sflag [#allocation4], 1
    %10 = vsyncpa %s9, 0
    %11 = vsyncpa [#allocation7], 0
    %12 = vsyncpa [#allocation5], 0
    %s13 = scalar_lea.sflag [#allocation5], 1
    %14 = vsyncpa %s13, 0
    loop: start=0, step=1, limit=4
    $region2: #{tpu_custom_call.1} parent=1 // loop_pre_header
      _
    $region3: #{tpu_custom_call.1} parent=1 // loop_header
      %s16 = sphi 0, %s20
      %p17 = scmp.ge.s32.totalorder %s16, 4
      %s23 = sphi 0, %s42
      %s24 = sphi 0, %s38
      %s25 = sphi 0, %s34
      %s26 = sphi 0, %s23
      %s27 = sphi 0, %s24
      %s28 = sphi 0, %s25
      %s29 = sphi 0, %s26
      %s30 = sphi 0, %s27
      %s31 = sphi 0, %s28
      %s47 = sphi 0, %s49
      %s50 = sphi 0, %s47
      %s51 = sphi 0, %s50
      %s67 = sphi 0, %s51
      %s75 = sphi 0, %s77
      %s78 = sphi 0, %s75
      %s79 = sphi 0, %s78
      %s95 = sphi 0, %s79
      %s101 = sphi 0, %s103
      %s104 = sphi 0, %s101
      %s105 = sphi 0, %s104
      %s121 = sphi 0, %s105
      %s129 = sphi 0, %s131
      %s132 = sphi 0, %s129
      %s133 = sphi 0, %s132
      %s149 = sphi 0, %s133
    $region4: #{tpu_custom_call.1} parent=1 // loop_header_branch
      %19 = sbr.rel (%p17) target = $region8
    $region5: #{tpu_custom_call.1} parent=1 // loop_body
      %s21 = ssub.s32 %s16, 1
      %s22 = ssub.s32 %s16, 2
      %s32 = sadd.s32 1, %s25
      %p33 = scmp.ge.s32.totalorder %s32, 1
      %s34 = scalar_select %p33, 0, %s32
      %s35 = sadd.s32 1, %s24
      %s36 = scalar_select %p33, %s35, %s24
      %p37 = scmp.ge.s32.totalorder %s36, 1
      %s38 = scalar_select %p37, 0, %s36
      %s39 = sadd.s32 1, %s23
      %s40 = scalar_select %p37, %s39, %s23
      %p41 = scmp.ge.s32.totalorder %s40, 2
      %s42 = scalar_select %p41, 0, %s40
      %s43 = ssub.s32 %s23, %s42
      %s44 = ssub.s32 %s25, %s34
      %s45 = sor.u32 %s43, %s44
      %p46 = scmp.eq.s32.totalorder %s45, 0
      %s48 = sadd.s32 %s47, 1
      %s49 = scalar_select %p46, %s47, %s48
      %p52 = pneg %p46
      %p53 = scmp.eq.s32.totalorder %s16, 1
      %p54 = por %p52, %p53
      %p55 = scmp.ne.s32.totalorder %s47, %s50
      %p56 = scmp.eq.s32.totalorder %s16, 0
      %p57 = por %p55, %p56
      %p58 = scmp.ne.s32.totalorder %s47, %s50
      %p59 = scmp.eq.s32.totalorder %s21, 1
      %p60 = por %p58, %p59
      %p61 = scmp.ne.s32.totalorder %s50, %s51
      %p62 = scmp.eq.s32.totalorder %s21, 0
      %p63 = por %p61, %p62
      %p64 = scmp.ne.s32.totalorder %s50, %s51
      %p65 = scmp.eq.s32.totalorder %s22, 1
      %p66 = por %p64, %p65
      %p68 = scmp.ne.s32.totalorder %s51, %s67
      %p69 = scmp.eq.s32.totalorder %s22, 0
      %p70 = por %p68, %p69
      %s71 = ssub.s32 %s25, %s34
      %s72 = ssub.s32 %s24, %s38
      %s73 = sor.u32 %s71, %s72
      %p74 = scmp.eq.s32.totalorder %s73, 0
      %s76 = sadd.s32 %s75, 1
      %s77 = scalar_select %p74, %s75, %s76
      %p80 = pneg %p74
      %p81 = scmp.eq.s32.totalorder %s16, 1
      %p82 = por %p80, %p81
      %p83 = scmp.ne.s32.totalorder %s75, %s78
      %p84 = scmp.eq.s32.totalorder %s16, 0
      %p85 = por %p83, %p84
      %p86 = scmp.ne.s32.totalorder %s75, %s78
      %p87 = scmp.eq.s32.totalorder %s21, 1
      %p88 = por %p86, %p87
      %p89 = scmp.ne.s32.totalorder %s78, %s79
      %p90 = scmp.eq.s32.totalorder %s21, 0
      %p91 = por %p89, %p90
      %p92 = scmp.ne.s32.totalorder %s78, %s79
      %p93 = scmp.eq.s32.totalorder %s22, 1
      %p94 = por %p92, %p93
      %p96 = scmp.ne.s32.totalorder %s79, %s95
      %p97 = scmp.eq.s32.totalorder %s22, 0
      %p98 = por %p96, %p97
      %s99 = ssub.s32 %s24, %s38
      %p100 = scmp.eq.s32.totalorder %s99, 0
      %s102 = sadd.s32 %s101, 1
      %s103 = scalar_select %p100, %s101, %s102
      %p106 = pneg %p100
      %p107 = scmp.eq.s32.totalorder %s16, 1
      %p108 = por %p106, %p107
      %p109 = scmp.ne.s32.totalorder %s101, %s104
      %p110 = scmp.eq.s32.totalorder %s16, 0
      %p111 = por %p109, %p110
      %p112 = scmp.ne.s32.totalorder %s101, %s104
      %p113 = scmp.eq.s32.totalorder %s21, 1
      %p114 = por %p112, %p113
      %p115 = scmp.ne.s32.totalorder %s104, %s105
      %p116 = scmp.eq.s32.totalorder %s21, 0
      %p117 = por %p115, %p116
      %p118 = scmp.ne.s32.totalorder %s104, %s105
      %p119 = scmp.eq.s32.totalorder %s22, 1
      %p120 = por %p118, %p119
      %p122 = scmp.ne.s32.totalorder %s105, %s121
      %p123 = scmp.eq.s32.totalorder %s22, 0
      %p124 = por %p122, %p123
      %s125 = ssub.s32 %s23, %s42
      %s126 = ssub.s32 %s24, %s38
      %s127 = sor.u32 %s125, %s126
      %p128 = scmp.eq.s32.totalorder %s127, 0
      %s130 = sadd.s32 %s129, 1
      %s131 = scalar_select %p128, %s129, %s130
      %p134 = pneg %p128
      %p135 = scmp.eq.s32.totalorder %s16, 1
      %p136 = por %p134, %p135
      %p137 = scmp.ne.s32.totalorder %s129, %s132
      %p138 = scmp.eq.s32.totalorder %s16, 0
      %p139 = por %p137, %p138
      %p140 = scmp.ne.s32.totalorder %s129, %s132
      %p141 = scmp.eq.s32.totalorder %s21, 1
      %p142 = por %p140, %p141
      %p143 = scmp.ne.s32.totalorder %s132, %s133
      %p144 = scmp.eq.s32.totalorder %s21, 0
      %p145 = por %p143, %p144
      %p146 = scmp.ne.s32.totalorder %s132, %s133
      %p147 = scmp.eq.s32.totalorder %s22, 1
      %p148 = por %p146, %p147
      %p150 = scmp.ne.s32.totalorder %s133, %s149
      %p151 = scmp.eq.s32.totalorder %s22, 0
      %p152 = por %p150, %p151
      %p153 = scmp.le.s32.totalorder 1, %s16
      %p154 = scmp.lt.s32.totalorder %s16, 3
      %p155 = pnand %p153, %p154
      %p156 = pneg %p155
      // Predicated region
      $region9: #{tpu_custom_call.1} parent=5 // pred_check
        _
      $region10: #{tpu_custom_call.1} parent=5 // pred_check_branch
        %158 = sbr.rel (%p155) target = $region12
      $region11: #{tpu_custom_call.1} parent=5 // pred_region
        %s159 = ssub.s32 %s16, 1
        // Predicated region
        $region13: #{tpu_custom_call.1} parent=11 // pred_check
          %p160 = pneg %p91
        $region14: #{tpu_custom_call.1} parent=11 // pred_check_branch
          %162 = sbr.rel (%p160) target = $region16
        $region15: #{tpu_custom_call.1} parent=11 // pred_region
          %s163 = smul.u32 16, %s28
          %s165 = ssub.s32 1024, 1024
          %166 = vsyncadd [#allocation7], %s165
          %s167 = sadd.s32 %s27, %s163
          %s168 = smul.addr %s167, 64
          %s169 = scalar_lea.hbm %s1, %s168
          %s170 = sshll.u32 [#allocation6], 4
          %s171 = int_to_ptr.vmem [resolvable:$true] %s170
          %176 = dma.hbm_to_vmem [thread:$0]  %s169, 1024, %s171, [#allocation7], 64, 64, 4
        $region16: #{tpu_custom_call.1} parent=11 // pred_fallthru
          _
        // Predicated region
        $region17: #{tpu_custom_call.1} parent=11 // pred_check
          %p177 = pneg %p117
        $region18: #{tpu_custom_call.1} parent=11 // pred_check_branch
          %179 = sbr.rel (%p177) target = $region20
        $region19: #{tpu_custom_call.1} parent=11 // pred_region
          %p180 = scmp.lt.s32.totalorder %s27, 0
          %s181 = scalar_select %p180, %s27, 0
          %s182 = scalar_lea.vmem %s2, %s181
        $region20: #{tpu_custom_call.1} parent=11 // pred_fallthru
          _
      $region12: #{tpu_custom_call.1} parent=5 // pred_fallthru
        _
      %p183 = scmp.lt.s32.totalorder %s16, 2
      // Predicated region
      $region21: #{tpu_custom_call.1} parent=5 // pred_check
        %p184 = pneg %p183
      $region22: #{tpu_custom_call.1} parent=5 // pred_check_branch
        %186 = sbr.rel (%p184) target = $region24
      $region23: #{tpu_custom_call.1} parent=5 // pred_region
        // Predicated region
        $region25: #{tpu_custom_call.1} parent=23 // pred_check
          %p187 = pneg %p57
        $region26: #{tpu_custom_call.1} parent=23 // pred_check_branch
          %189 = sbr.rel (%p187) target = $region28
        $region27: #{tpu_custom_call.1} parent=23 // pred_region
          %s190 = sand.u32 %s47, 1
          %s191 = scalar_lea.sflag [#allocation4], %s190
          %s192 = sand.u32 %s47, 1
          %s193 = smul.addr %s192, 128
          %s194 = scalar_lea.vmem [#allocation3], %s193
          %s195 = smul.u32 32, %s23
          %s197 = ssub.s32 2048, 2048
          %198 = vsyncadd %s191, %s197
          %s199 = sadd.s32 %s25, %s195
          %s200 = smul.addr %s199, 64
          %s201 = scalar_lea.hbm %s0, %s200
          %s202 = sshll.u32 %s194, 4
          %s203 = int_to_ptr.vmem [resolvable:$true] %s202
          %208 = dma.hbm_to_vmem [thread:$0]  %s201, 2048, %s203, %s191, 64, 64, 4
        $region28: #{tpu_custom_call.1} parent=23 // pred_fallthru
          _
      $region24: #{tpu_custom_call.1} parent=5 // pred_fallthru
        _
      %p209 = scmp.le.s32.totalorder 1, %s16
      %p210 = scmp.lt.s32.totalorder %s16, 3
      %p211 = pnand %p209, %p210
      %p212 = pneg %p211
      // Predicated region
      $region29: #{tpu_custom_call.1} parent=5 // pred_check
        _
      $region30: #{tpu_custom_call.1} parent=5 // pred_check_branch
        %214 = sbr.rel (%p211) target = $region32
      $region31: #{tpu_custom_call.1} parent=5 // pred_region
        %s215 = ssub.s32 %s16, 1
        %s216 = sand.u32 %s50, 1
        %s217 = scalar_lea.sflag [#allocation4], %s216
        %s218 = sand.u32 %s50, 1
        %s219 = smul.addr %s218, 128
        %s220 = scalar_lea.vmem [#allocation3], %s219
        // Predicated region
        $region33: #{tpu_custom_call.1} parent=31 // pred_check
          %p221 = pneg %p63
        $region34: #{tpu_custom_call.1} parent=31 // pred_check_branch
          %223 = sbr.rel (%p221) target = $region36
        $region35: #{tpu_custom_call.1} parent=31 // pred_region
          %224 = dma.done %s217, 2048
        $region36: #{tpu_custom_call.1} parent=31 // pred_fallthru
          _
        // Predicated region
        $region37: #{tpu_custom_call.1} parent=31 // pred_check
          %p225 = pneg %p91
        $region38: #{tpu_custom_call.1} parent=31 // pred_check_branch
          %227 = sbr.rel (%p225) target = $region40
        $region39: #{tpu_custom_call.1} parent=31 // pred_region
          %228 = dma.done [#allocation7], 1024
        $region40: #{tpu_custom_call.1} parent=31 // pred_fallthru
          _
        %s229 = sand.u32 %s50, 1
        %s230 = scalar_lea.sflag [#allocation4], %s229
        %s231 = sand.u32 %s50, 1
        %s232 = smul.addr %s231, 128
        %s233 = scalar_lea.vmem [#allocation3], %s232
        %p234 = pneg %p63
        %p235 = pneg %p60
        %p236 = pneg %p91
        %p237 = pneg %p88
        %p238 = scmp.lt.s32.totalorder %s27, 0
        %s239 = scalar_select %p238, %s27, 0
        %s240 = scalar_lea.vmem %s2, %s239
        %p241 = pneg %p117
        %p242 = pneg %p114
        %p243 = pneg %p145
        %p244 = pneg %p142
        %s245 = sand.u32 %s132, 1
        %s246 = scalar_lea.sflag [#allocation5], %s245
        %s247 = sand.u32 %s132, 1
        %s248 = smul.addr %s247, 128
        %s249 = scalar_lea.vmem [#allocation8], %s248
        %s250 = smul.u32 32, %s26
        %s251 = smul.u32 16, %s28
        %p252 = scmp.lt.s32.totalorder %s27, 0
        %s253 = scalar_select %p252, %s27, 0
        %s254 = scalar_lea.vmem %s2, %s253
        %s255 = smul.u32 32, %s26
        %p257 = scmp.eq.s32.totalorder %s28, 0
        // Predicated region
        $region41: #{tpu_custom_call.1} parent=31 // pred_check
          %p258 = pneg %p257
        $region42: #{tpu_custom_call.1} parent=31 // pred_check_branch
          %260 = sbr.rel (%p258) target = $region44
        $region43: #{tpu_custom_call.1} parent=31 // pred_region
          %261 = vst [vmem:[#allocation2] sm:$0xff] 0.0
          %262 = vst [vmem:[#allocation2 + $0x8] sm:$0xff] 0.0
          %263 = vst [vmem:[#allocation2 + $0x10] sm:$0xff] 0.0
          %264 = vst [vmem:[#allocation2 + $0x18] sm:$0xff] 0.0
          %265 = vst [vmem:[#allocation2 + $0x20] sm:$0xff] 0.0
          %266 = vst [vmem:[#allocation2 + $0x28] sm:$0xff] 0.0
          %267 = vst [vmem:[#allocation2 + $0x30] sm:$0xff] 0.0
          %268 = vst [vmem:[#allocation2 + $0x38] sm:$0xff] 0.0
          %269 = vst [vmem:[#allocation2 + $0x40] sm:$0xff] 0.0
          %270 = vst [vmem:[#allocation2 + $0x48] sm:$0xff] 0.0
          %271 = vst [vmem:[#allocation2 + $0x50] sm:$0xff] 0.0
          %272 = vst [vmem:[#allocation2 + $0x58] sm:$0xff] 0.0
          %273 = vst [vmem:[#allocation2 + $0x60] sm:$0xff] 0.0
          %274 = vst [vmem:[#allocation2 + $0x68] sm:$0xff] 0.0
          %275 = vst [vmem:[#allocation2 + $0x70] sm:$0xff] 0.0
          %276 = vst [vmem:[#allocation2 + $0x78] sm:$0xff] 0.0
          %277 = vst [vmem:[#allocation2 + $0x80] sm:$0xff] 0.0
          %278 = vst [vmem:[#allocation2 + $0x88] sm:$0xff] 0.0
          %279 = vst [vmem:[#allocation2 + $0x90] sm:$0xff] 0.0
          %280 = vst [vmem:[#allocation2 + $0x98] sm:$0xff] 0.0
          %281 = vst [vmem:[#allocation2 + $0xa0] sm:$0xff] 0.0
          %282 = vst [vmem:[#allocation2 + $0xa8] sm:$0xff] 0.0
          %283 = vst [vmem:[#allocation2 + $0xb0] sm:$0xff] 0.0
          %284 = vst [vmem:[#allocation2 + $0xb8] sm:$0xff] 0.0
          %285 = vst [vmem:[#allocation2 + $0xc0] sm:$0xff] 0.0
          %286 = vst [vmem:[#allocation2 + $0xc8] sm:$0xff] 0.0
          %287 = vst [vmem:[#allocation2 + $0xd0] sm:$0xff] 0.0
          %288 = vst [vmem:[#allocation2 + $0xd8] sm:$0xff] 0.0
          %289 = vst [vmem:[#allocation2 + $0xe0] sm:$0xff] 0.0
          %290 = vst [vmem:[#allocation2 + $0xe8] sm:$0xff] 0.0
          %291 = vst [vmem:[#allocation2 + $0xf0] sm:$0xff] 0.0
          %292 = vst [vmem:[#allocation2 + $0xf8] sm:$0xff] 0.0
        $region44: #{tpu_custom_call.1} parent=31 // pred_fallthru
          _
        %v293 = vld [vmem:[#allocation2] sm:$0xff]
        %v294 = vld [vmem:[#allocation2 + $0x8] sm:$0xff]
        %v295 = vld [vmem:[#allocation2 + $0x10] sm:$0xff]
        %v296 = vld [vmem:[#allocation2 + $0x18] sm:$0xff]
        %v297 = vld [vmem:[#allocation2 + $0x20] sm:$0xff]
        %v298 = vld [vmem:[#allocation2 + $0x28] sm:$0xff]
        %v299 = vld [vmem:[#allocation2 + $0x30] sm:$0xff]
        %v300 = vld [vmem:[#allocation2 + $0x38] sm:$0xff]
        %v301 = vld [vmem:[#allocation2 + $0x40] sm:$0xff]
        %v302 = vld [vmem:[#allocation2 + $0x48] sm:$0xff]
        %v303 = vld [vmem:[#allocation2 + $0x50] sm:$0xff]
        %v304 = vld [vmem:[#allocation2 + $0x58] sm:$0xff]
        %v305 = vld [vmem:[#allocation2 + $0x60] sm:$0xff]
        %v306 = vld [vmem:[#allocation2 + $0x68] sm:$0xff]
        %v307 = vld [vmem:[#allocation2 + $0x70] sm:$0xff]
        %v308 = vld [vmem:[#allocation2 + $0x78] sm:$0xff]
        %v309 = vld [vmem:[#allocation2 + $0x80] sm:$0xff]
        %v310 = vld [vmem:[#allocation2 + $0x88] sm:$0xff]
        %v311 = vld [vmem:[#allocation2 + $0x90] sm:$0xff]
        %v312 = vld [vmem:[#allocation2 + $0x98] sm:$0xff]
        %v313 = vld [vmem:[#allocation2 + $0xa0] sm:$0xff]
        %v314 = vld [vmem:[#allocation2 + $0xa8] sm:$0xff]
        %v315 = vld [vmem:[#allocation2 + $0xb0] sm:$0xff]
        %v316 = vld [vmem:[#allocation2 + $0xb8] sm:$0xff]
        %v317 = vld [vmem:[#allocation2 + $0xc0] sm:$0xff]
        %v318 = vld [vmem:[#allocation2 + $0xc8] sm:$0xff]
        %v319 = vld [vmem:[#allocation2 + $0xd0] sm:$0xff]
        %v320 = vld [vmem:[#allocation2 + $0xd8] sm:$0xff]
        %v321 = vld [vmem:[#allocation2 + $0xe0] sm:$0xff]
        %v322 = vld [vmem:[#allocation2 + $0xe8] sm:$0xff]
        %v323 = vld [vmem:[#allocation2 + $0xf0] sm:$0xff]
        %v324 = vld [vmem:[#allocation2 + $0xf8] sm:$0xff]
        %v325 = vld [vmem:[%s220] sm:$0xf]
        %v326 = vld [vmem:[%s220 + $0x4] sm:$0xf]
        %v327 = vld [vmem:[%s220 + $0x8] sm:$0xf]
        %v328 = vld [vmem:[%s220 + $0xc] sm:$0xf]
        %v329 = vld [vmem:[%s220 + $0x10] sm:$0xf]
        %v330 = vld [vmem:[%s220 + $0x14] sm:$0xf]
        %v331 = vld [vmem:[%s220 + $0x18] sm:$0xf]
        %v332 = vld [vmem:[%s220 + $0x1c] sm:$0xf]
        %v333 = vld [vmem:[%s220 + $0x20] sm:$0xf]
        %v334 = vld [vmem:[%s220 + $0x24] sm:$0xf]
        %v335 = vld [vmem:[%s220 + $0x28] sm:$0xf]
        %v336 = vld [vmem:[%s220 + $0x2c] sm:$0xf]
        %v337 = vld [vmem:[%s220 + $0x30] sm:$0xf]
        %v338 = vld [vmem:[%s220 + $0x34] sm:$0xf]
        %v339 = vld [vmem:[%s220 + $0x38] sm:$0xf]
        %v340 = vld [vmem:[%s220 + $0x3c] sm:$0xf]
        %v341 = vld [vmem:[%s220 + $0x40] sm:$0xf]
        %v342 = vld [vmem:[%s220 + $0x44] sm:$0xf]
        %v343 = vld [vmem:[%s220 + $0x48] sm:$0xf]
        %v344 = vld [vmem:[%s220 + $0x4c] sm:$0xf]
        %v345 = vld [vmem:[%s220 + $0x50] sm:$0xf]
        %v346 = vld [vmem:[%s220 + $0x54] sm:$0xf]
        %v347 = vld [vmem:[%s220 + $0x58] sm:$0xf]
        %v348 = vld [vmem:[%s220 + $0x5c] sm:$0xf]
        %v349 = vld [vmem:[%s220 + $0x60] sm:$0xf]
        %v350 = vld [vmem:[%s220 + $0x64] sm:$0xf]
        %v351 = vld [vmem:[%s220 + $0x68] sm:$0xf]
        %v352 = vld [vmem:[%s220 + $0x6c] sm:$0xf]
        %v353 = vld [vmem:[%s220 + $0x70] sm:$0xf]
        %v354 = vld [vmem:[%s220 + $0x74] sm:$0xf]
        %v355 = vld [vmem:[%s220 + $0x78] sm:$0xf]
        %v356 = vld [vmem:[%s220 + $0x7c] sm:$0xf]
        %v357 = vld [vmem:[#allocation6] sm:$0xf]
        %v358 = vld [vmem:[#allocation6 + $0x4] sm:$0xf]
        %v359 = vld [vmem:[#allocation6 + $0x8] sm:$0xf]
        %v360 = vld [vmem:[#allocation6 + $0xc] sm:$0xf]
        %v361 = vld [vmem:[#allocation6 + $0x10] sm:$0xf]
        %v362 = vld [vmem:[#allocation6 + $0x14] sm:$0xf]
        %v363 = vld [vmem:[#allocation6 + $0x18] sm:$0xf]
        %v364 = vld [vmem:[#allocation6 + $0x1c] sm:$0xf]
        %v365 = vld [vmem:[#allocation6 + $0x20] sm:$0xf]
        %v366 = vld [vmem:[#allocation6 + $0x24] sm:$0xf]
        %v367 = vld [vmem:[#allocation6 + $0x28] sm:$0xf]
        %v368 = vld [vmem:[#allocation6 + $0x2c] sm:$0xf]
        %v369 = vld [vmem:[#allocation6 + $0x30] sm:$0xf]
        %v370 = vld [vmem:[#allocation6 + $0x34] sm:$0xf]
        %v371 = vld [vmem:[#allocation6 + $0x38] sm:$0xf]
        %v372 = vld [vmem:[#allocation6 + $0x3c] sm:$0xf]
        %v405 = vunpack.c.l.b16 %v325
        %v406 = vunpack.c.l.b16 %v326
        %v407 = vunpack.c.l.b16 %v327
        %v408 = vunpack.c.l.b16 %v328
        %v409 = vunpack.c.l.b16 %v329
        %v410 = vunpack.c.l.b16 %v330
        %v411 = vunpack.c.l.b16 %v331
        %v412 = vunpack.c.l.b16 %v332
        %v413 = vunpack.c.l.b16 %v333
        %v414 = vunpack.c.l.b16 %v334
        %v415 = vunpack.c.l.b16 %v335
        %v416 = vunpack.c.l.b16 %v336
        %v417 = vunpack.c.l.b16 %v337
        %v418 = vunpack.c.l.b16 %v338
        %v419 = vunpack.c.l.b16 %v339
        %v420 = vunpack.c.l.b16 %v340
        %v421 = vunpack.c.l.b16 %v341
        %v422 = vunpack.c.l.b16 %v342
        %v423 = vunpack.c.l.b16 %v343
        %v424 = vunpack.c.l.b16 %v344
        %v425 = vunpack.c.l.b16 %v345
        %v426 = vunpack.c.l.b16 %v346
        %v427 = vunpack.c.l.b16 %v347
        %v428 = vunpack.c.l.b16 %v348
        %v429 = vunpack.c.l.b16 %v349
        %v430 = vunpack.c.l.b16 %v350
        %v431 = vunpack.c.l.b16 %v351
        %v432 = vunpack.c.l.b16 %v352
        %v433 = vunpack.c.l.b16 %v353
        %v434 = vunpack.c.l.b16 %v354
        %v435 = vunpack.c.l.b16 %v355
        %v436 = vunpack.c.l.b16 %v356
        %v437 = vpack.c.b16 %v406, %v405
        %v438 = vpack.c.b16 %v408, %v407
        %v439 = vpack.c.b16 %v410, %v409
        %v440 = vpack.c.b16 %v412, %v411
        %v441 = vpack.c.b16 %v414, %v413
        %v442 = vpack.c.b16 %v416, %v415
        %v443 = vpack.c.b16 %v418, %v417
        %v444 = vpack.c.b16 %v420, %v419
        %v445 = vpack.c.b16 %v422, %v421
        %v446 = vpack.c.b16 %v424, %v423
        %v447 = vpack.c.b16 %v426, %v425
        %v448 = vpack.c.b16 %v428, %v427
        %v449 = vpack.c.b16 %v430, %v429
        %v450 = vpack.c.b16 %v432, %v431
        %v451 = vpack.c.b16 %v434, %v433
        %v452 = vpack.c.b16 %v436, %v435
        %v485 = vunpack.c.l.b16 %v357
        %v486 = vunpack.c.l.b16 %v358
        %v487 = vunpack.c.l.b16 %v359
        %v488 = vunpack.c.l.b16 %v360
        %v489 = vunpack.c.l.b16 %v361
        %v490 = vunpack.c.l.b16 %v362
        %v491 = vunpack.c.l.b16 %v363
        %v492 = vunpack.c.l.b16 %v364
        %v493 = vunpack.c.l.b16 %v365
        %v494 = vunpack.c.l.b16 %v366
        %v495 = vunpack.c.l.b16 %v367
        %v496 = vunpack.c.l.b16 %v368
        %v497 = vunpack.c.l.b16 %v369
        %v498 = vunpack.c.l.b16 %v370
        %v499 = vunpack.c.l.b16 %v371
        %v500 = vunpack.c.l.b16 %v372
        %v501 = vpack.c.b16 %v486, %v485
        %v502 = vpack.c.b16 %v488, %v487
        %v503 = vpack.c.b16 %v490, %v489
        %v504 = vpack.c.b16 %v492, %v491
        %v505 = vpack.c.b16 %v494, %v493
        %v506 = vpack.c.b16 %v496, %v495
        %v507 = vpack.c.b16 %v498, %v497
        %v508 = vpack.c.b16 %v500, %v499
        %517 = vmatprep.subr.bf16.mxu0 0
        %518 = vmatpush1.bf16.msra.mxu0 %v501
        %519 = vmatprep.subr.bf16.mxu0 0
        %520 = vmatpush1.bf16.msra.mxu0 %v502
        %521 = vmatprep.subr.bf16.mxu0 0
        %522 = vmatpush1.bf16.msra.mxu0 %v503
        %523 = vmatprep.subr.bf16.mxu0 0
        %524 = vmatpush1.bf16.msra.mxu0 %v504
        %525 = vmatprep.subr.bf16.mxu0 0
        %526 = vmatpush1.bf16.msra.mxu0 %v505
        %527 = vmatprep.subr.bf16.mxu0 0
        %528 = vmatpush1.bf16.msra.mxu0 %v506
        %529 = vmatprep.subr.bf16.mxu0 0
        %530 = vmatpush1.bf16.msra.mxu0 %v507
        %531 = vmatprep.subr.bf16.mxu0 0
        %532 = vmatpush1.bf16.msra.mxu0 %v508
        %533 = vmatprep.subr.bf16.mxu0 0
        %534 = vmatpush1.bf16.msra.mxu0 0
        %535 = vmatprep.subr.bf16.mxu0 0
        %536 = vmatpush1.bf16.msra.mxu0 0
        %537 = vmatprep.subr.bf16.mxu0 0
        %538 = vmatpush1.bf16.msra.mxu0 0
        %539 = vmatprep.subr.bf16.mxu0 0
        %540 = vmatpush1.bf16.msra.mxu0 0
        %541 = vmatprep.subr.bf16.mxu0 0
        %542 = vmatpush1.bf16.msra.mxu0 0
        %543 = vmatprep.subr.bf16.mxu0 0
        %544 = vmatpush1.bf16.msra.mxu0 0
        %545 = vmatprep.subr.bf16.mxu0 0
        %546 = vmatpush1.bf16.msra.mxu0 0
        %547 = vmatprep.subr.bf16.mxu0 0
        %548 = vmatpush1.bf16.msra.mxu0 0
        %549 = vmatprep.mubr.bf16.mxu0 0
        %550 = vmatmul.mubr.bf16.gmra.mrb[0].mxu0 %v437
        %v551 = vpop.f32.mrb[0].mxu0
        %v552 = vadd.f32 0.0, %v551
        %v553 = vpop.f32.mrb[0].mxu0
        %v554 = vpop.f32.mrb[0].mxu0
        %v555 = vadd.f32 0.0, %v554
        %v556 = vpop.f32.mrb[0].mxu0
        %557 = vmatprep.mubr.bf16.mxu0 0
        %558 = vmatmul.mubr.bf16.gmra.mrb[0].mxu0 %v438
        %v559 = vpop.f32.mrb[0].mxu0
        %v560 = vadd.f32 0.0, %v559
        %v561 = vpop.f32.mrb[0].mxu0
        %v562 = vpop.f32.mrb[0].mxu0
        %v563 = vadd.f32 0.0, %v562
        %v564 = vpop.f32.mrb[0].mxu0
        %565 = vmatprep.mubr.bf16.mxu0 0
        %566 = vmatmul.mubr.bf16.gmra.mrb[0].mxu0 %v439
        %v567 = vpop.f32.mrb[0].mxu0
        %v568 = vadd.f32 0.0, %v567
        %v569 = vpop.f32.mrb[0].mxu0
        %v570 = vpop.f32.mrb[0].mxu0
        %v571 = vadd.f32 0.0, %v570
        %v572 = vpop.f32.mrb[0].mxu0
        %573 = vmatprep.mubr.bf16.mxu0 0
        %574 = vmatmul.mubr.bf16.gmra.mrb[0].mxu0 %v440
        %v575 = vpop.f32.mrb[0].mxu0
        %v576 = vadd.f32 0.0, %v575
        %v577 = vpop.f32.mrb[0].mxu0
        %v578 = vpop.f32.mrb[0].mxu0
        %v579 = vadd.f32 0.0, %v578
        %v580 = vpop.f32.mrb[0].mxu0
        %581 = vmatprep.mubr.bf16.mxu0 0
        %582 = vmatmul.mubr.bf16.gmra.mrb[0].mxu0 %v441
        %v583 = vpop.f32.mrb[0].mxu0
        %v584 = vadd.f32 0.0, %v583
        %v585 = vpop.f32.mrb[0].mxu0
        %v586 = vpop.f32.mrb[0].mxu0
        %v587 = vadd.f32 0.0, %v586
        %v588 = vpop.f32.mrb[0].mxu0
        %589 = vmatprep.mubr.bf16.mxu0 0
        %590 = vmatmul.mubr.bf16.gmra.mrb[0].mxu0 %v442
        %v591 = vpop.f32.mrb[0].mxu0
        %v592 = vadd.f32 0.0, %v591
        %v593 = vpop.f32.mrb[0].mxu0
        %v594 = vpop.f32.mrb[0].mxu0
        %v595 = vadd.f32 0.0, %v594
        %v596 = vpop.f32.mrb[0].mxu0
        %597 = vmatprep.mubr.bf16.mxu0 0
        %598 = vmatmul.mubr.bf16.gmra.mrb[0].mxu0 %v443
        %v599 = vpop.f32.mrb[0].mxu0
        %v600 = vadd.f32 0.0, %v599
        %v601 = vpop.f32.mrb[0].mxu0
        %v602 = vpop.f32.mrb[0].mxu0
        %v603 = vadd.f32 0.0, %v602
        %v604 = vpop.f32.mrb[0].mxu0
        %605 = vmatprep.mubr.bf16.mxu0 0
        %606 = vmatmul.mubr.bf16.gmra.mrb[0].mxu0 %v444
        %v607 = vpop.f32.mrb[0].mxu0
        %v608 = vadd.f32 0.0, %v607
        %v609 = vpop.f32.mrb[0].mxu0
        %v610 = vpop.f32.mrb[0].mxu0
        %v611 = vadd.f32 0.0, %v610
        %v612 = vpop.f32.mrb[0].mxu0
        %613 = vmatprep.mubr.bf16.mxu0 0
        %614 = vmatmul.mubr.bf16.gmra.mrb[0].mxu0 %v445
        %v615 = vpop.f32.mrb[0].mxu0
        %v616 = vadd.f32 0.0, %v615
        %v617 = vpop.f32.mrb[0].mxu0
        %v618 = vpop.f32.mrb[0].mxu0
        %v619 = vadd.f32 0.0, %v618
        %v620 = vpop.f32.mrb[0].mxu0
        %621 = vmatprep.mubr.bf16.mxu0 0
        %622 = vmatmul.mubr.bf16.gmra.mrb[0].mxu0 %v446
        %v623 = vpop.f32.mrb[0].mxu0
        %v624 = vadd.f32 0.0, %v623
        %v625 = vpop.f32.mrb[0].mxu0
        %v626 = vpop.f32.mrb[0].mxu0
        %v627 = vadd.f32 0.0, %v626
        %v628 = vpop.f32.mrb[0].mxu0
        %629 = vmatprep.mubr.bf16.mxu0 0
        %630 = vmatmul.mubr.bf16.gmra.mrb[0].mxu0 %v447
        %v631 = vpop.f32.mrb[0].mxu0
        %v632 = vadd.f32 0.0, %v631
        %v633 = vpop.f32.mrb[0].mxu0
        %v634 = vpop.f32.mrb[0].mxu0
        %v635 = vadd.f32 0.0, %v634
        %v636 = vpop.f32.mrb[0].mxu0
        %637 = vmatprep.mubr.bf16.mxu0 0
        %638 = vmatmul.mubr.bf16.gmra.mrb[0].mxu0 %v448
        %v639 = vpop.f32.mrb[0].mxu0
        %v640 = vadd.f32 0.0, %v639
        %v641 = vpop.f32.mrb[0].mxu0
        %v642 = vpop.f32.mrb[0].mxu0
        %v643 = vadd.f32 0.0, %v642
        %v644 = vpop.f32.mrb[0].mxu0
        %645 = vmatprep.mubr.bf16.mxu0 0
        %646 = vmatmul.mubr.bf16.gmra.mrb[0].mxu0 %v449
        %v647 = vpop.f32.mrb[0].mxu0
        %v648 = vadd.f32 0.0, %v647
        %v649 = vpop.f32.mrb[0].mxu0
        %v650 = vpop.f32.mrb[0].mxu0
        %v651 = vadd.f32 0.0, %v650
        %v652 = vpop.f32.mrb[0].mxu0
        %653 = vmatprep.mubr.bf16.mxu0 0
        %654 = vmatmul.mubr.bf16.gmra.mrb[0].mxu0 %v450
        %v655 = vpop.f32.mrb[0].mxu0
        %v656 = vadd.f32 0.0, %v655
        %v657 = vpop.f32.mrb[0].mxu0
        %v658 = vpop.f32.mrb[0].mxu0
        %v659 = vadd.f32 0.0, %v658
        %v660 = vpop.f32.mrb[0].mxu0
        %661 = vmatprep.mubr.bf16.mxu0 0
        %662 = vmatmul.mubr.bf16.gmra.mrb[0].mxu0 %v451
        %v663 = vpop.f32.mrb[0].mxu0
        %v664 = vadd.f32 0.0, %v663
        %v665 = vpop.f32.mrb[0].mxu0
        %v666 = vpop.f32.mrb[0].mxu0
        %v667 = vadd.f32 0.0, %v666
        %v668 = vpop.f32.mrb[0].mxu0
        %669 = vmatprep.mubr.bf16.mxu0 0
        %670 = vmatmul.mubr.bf16.gmra.mrb[0].mxu0 %v452
        %v671 = vpop.f32.mrb[0].mxu0
        %v672 = vadd.f32 0.0, %v671
        %v673 = vpop.f32.mrb[0].mxu0
        %v674 = vpop.f32.mrb[0].mxu0
        %v675 = vadd.f32 0.0, %v674
        %v676 = vpop.f32.mrb[0].mxu0
        %677 = vdwg.mxu0
        %v678 = vadd.f32 %v293, %v552
        %v679 = vadd.f32 %v294, %v555
        %v680 = vadd.f32 %v295, %v560
        %v681 = vadd.f32 %v296, %v563
        %v682 = vadd.f32 %v297, %v568
        %v683 = vadd.f32 %v298, %v571
        %v684 = vadd.f32 %v299, %v576
        %v685 = vadd.f32 %v300, %v579
        %v686 = vadd.f32 %v301, %v584
        %v687 = vadd.f32 %v302, %v587
        %v688 = vadd.f32 %v303, %v592
        %v689 = vadd.f32 %v304, %v595
        %v690 = vadd.f32 %v305, %v600
        %v691 = vadd.f32 %v306, %v603
        %v692 = vadd.f32 %v307, %v608
        %v693 = vadd.f32 %v308, %v611
        %v694 = vadd.f32 %v309, %v616
        %v695 = vadd.f32 %v310, %v619
        %v696 = vadd.f32 %v311, %v624
        %v697 = vadd.f32 %v312, %v627
        %v698 = vadd.f32 %v313, %v632
        %v699 = vadd.f32 %v314, %v635
        %v700 = vadd.f32 %v315, %v640
        %v701 = vadd.f32 %v316, %v643
        %v702 = vadd.f32 %v317, %v648
        %v703 = vadd.f32 %v318, %v651
        %v704 = vadd.f32 %v319, %v656
        %v705 = vadd.f32 %v320, %v659
        %v706 = vadd.f32 %v321, %v664
        %v707 = vadd.f32 %v322, %v667
        %v708 = vadd.f32 %v323, %v672
        %v709 = vadd.f32 %v324, %v675
        %710 = vst [vmem:[#allocation2] sm:$0xff] %v678
        %711 = vst [vmem:[#allocation2 + $0x8] sm:$0xff] %v679
        %712 = vst [vmem:[#allocation2 + $0x10] sm:$0xff] %v680
        %713 = vst [vmem:[#allocation2 + $0x18] sm:$0xff] %v681
        %714 = vst [vmem:[#allocation2 + $0x20] sm:$0xff] %v682
        %715 = vst [vmem:[#allocation2 + $0x28] sm:$0xff] %v683
        %716 = vst [vmem:[#allocation2 + $0x30] sm:$0xff] %v684
        %717 = vst [vmem:[#allocation2 + $0x38] sm:$0xff] %v685
        %718 = vst [vmem:[#allocation2 + $0x40] sm:$0xff] %v686
        %719 = vst [vmem:[#allocation2 + $0x48] sm:$0xff] %v687
        %720 = vst [vmem:[#allocation2 + $0x50] sm:$0xff] %v688
        %721 = vst [vmem:[#allocation2 + $0x58] sm:$0xff] %v689
        %722 = vst [vmem:[#allocation2 + $0x60] sm:$0xff] %v690
        %723 = vst [vmem:[#allocation2 + $0x68] sm:$0xff] %v691
        %724 = vst [vmem:[#allocation2 + $0x70] sm:$0xff] %v692
        %725 = vst [vmem:[#allocation2 + $0x78] sm:$0xff] %v693
        %726 = vst [vmem:[#allocation2 + $0x80] sm:$0xff] %v694
        %727 = vst [vmem:[#allocation2 + $0x88] sm:$0xff] %v695
        %728 = vst [vmem:[#allocation2 + $0x90] sm:$0xff] %v696
        %729 = vst [vmem:[#allocation2 + $0x98] sm:$0xff] %v697
        %730 = vst [vmem:[#allocation2 + $0xa0] sm:$0xff] %v698
        %731 = vst [vmem:[#allocation2 + $0xa8] sm:$0xff] %v699
        %732 = vst [vmem:[#allocation2 + $0xb0] sm:$0xff] %v700
        %733 = vst [vmem:[#allocation2 + $0xb8] sm:$0xff] %v701
        %734 = vst [vmem:[#allocation2 + $0xc0] sm:$0xff] %v702
        %735 = vst [vmem:[#allocation2 + $0xc8] sm:$0xff] %v703
        %736 = vst [vmem:[#allocation2 + $0xd0] sm:$0xff] %v704
        %737 = vst [vmem:[#allocation2 + $0xd8] sm:$0xff] %v705
        %738 = vst [vmem:[#allocation2 + $0xe0] sm:$0xff] %v706
        %739 = vst [vmem:[#allocation2 + $0xe8] sm:$0xff] %v707
        %740 = vst [vmem:[#allocation2 + $0xf0] sm:$0xff] %v708
        %741 = vst [vmem:[#allocation2 + $0xf8] sm:$0xff] %v709
        // Predicated region
        $region45: #{tpu_custom_call.1} parent=31 // pred_check
          %p742 = pneg %p257
        $region46: #{tpu_custom_call.1} parent=31 // pred_check_branch
          %744 = sbr.rel (%p742) target = $region48
        $region47: #{tpu_custom_call.1} parent=31 // pred_region
          %v745 = vld [vmem:[#allocation2] sm:$0xff]
          %v746 = vld [vmem:[#allocation2 + $0x8] sm:$0xff]
          %v747 = vld [vmem:[#allocation2 + $0x10] sm:$0xff]
          %v748 = vld [vmem:[#allocation2 + $0x18] sm:$0xff]
          %v749 = vld [vmem:[#allocation2 + $0x20] sm:$0xff]
          %v750 = vld [vmem:[#allocation2 + $0x28] sm:$0xff]
          %v751 = vld [vmem:[#allocation2 + $0x30] sm:$0xff]
          %v752 = vld [vmem:[#allocation2 + $0x38] sm:$0xff]
          %v753 = vld [vmem:[#allocation2 + $0x40] sm:$0xff]
          %v754 = vld [vmem:[#allocation2 + $0x48] sm:$0xff]
          %v755 = vld [vmem:[#allocation2 + $0x50] sm:$0xff]
          %v756 = vld [vmem:[#allocation2 + $0x58] sm:$0xff]
          %v757 = vld [vmem:[#allocation2 + $0x60] sm:$0xff]
          %v758 = vld [vmem:[#allocation2 + $0x68] sm:$0xff]
          %v759 = vld [vmem:[#allocation2 + $0x70] sm:$0xff]
          %v760 = vld [vmem:[#allocation2 + $0x78] sm:$0xff]
          %v761 = vld [vmem:[#allocation2 + $0x80] sm:$0xff]
          %v762 = vld [vmem:[#allocation2 + $0x88] sm:$0xff]
          %v763 = vld [vmem:[#allocation2 + $0x90] sm:$0xff]
          %v764 = vld [vmem:[#allocation2 + $0x98] sm:$0xff]
          %v765 = vld [vmem:[#allocation2 + $0xa0] sm:$0xff]
          %v766 = vld [vmem:[#allocation2 + $0xa8] sm:$0xff]
          %v767 = vld [vmem:[#allocation2 + $0xb0] sm:$0xff]
          %v768 = vld [vmem:[#allocation2 + $0xb8] sm:$0xff]
          %v769 = vld [vmem:[#allocation2 + $0xc0] sm:$0xff]
          %v770 = vld [vmem:[#allocation2 + $0xc8] sm:$0xff]
          %v771 = vld [vmem:[#allocation2 + $0xd0] sm:$0xff]
          %v772 = vld [vmem:[#allocation2 + $0xd8] sm:$0xff]
          %v773 = vld [vmem:[#allocation2 + $0xe0] sm:$0xff]
          %v774 = vld [vmem:[#allocation2 + $0xe8] sm:$0xff]
          %v775 = vld [vmem:[#allocation2 + $0xf0] sm:$0xff]
          %v776 = vld [vmem:[#allocation2 + $0xf8] sm:$0xff]
          %v777 = vld [vmem:[%s254] sm:$0x1]
          %v779 = vlaneseq
          %v780 = vshrl.u32 %v779, 7
          %v781 = vsub.s32 0, %v780
          %v782 = vrot.slane %v777, %v781
          %v784 = vadd.f32 %v745, %v782
          %v785 = vadd.f32 %v746, %v782
          %v786 = vadd.f32 %v747, %v782
          %v787 = vadd.f32 %v748, %v782
          %v788 = vadd.f32 %v749, %v782
          %v789 = vadd.f32 %v750, %v782
          %v790 = vadd.f32 %v751, %v782
          %v791 = vadd.f32 %v752, %v782
          %v792 = vadd.f32 %v753, %v782
          %v793 = vadd.f32 %v754, %v782
          %v794 = vadd.f32 %v755, %v782
          %v795 = vadd.f32 %v756, %v782
          %v796 = vadd.f32 %v757, %v782
          %v797 = vadd.f32 %v758, %v782
          %v798 = vadd.f32 %v759, %v782
          %v799 = vadd.f32 %v760, %v782
          %v800 = vadd.f32 %v761, %v782
          %v801 = vadd.f32 %v762, %v782
          %v802 = vadd.f32 %v763, %v782
          %v803 = vadd.f32 %v764, %v782
          %v804 = vadd.f32 %v765, %v782
          %v805 = vadd.f32 %v766, %v782
          %v806 = vadd.f32 %v767, %v782
          %v807 = vadd.f32 %v768, %v782
          %v808 = vadd.f32 %v769, %v782
          %v809 = vadd.f32 %v770, %v782
          %v810 = vadd.f32 %v771, %v782
          %v811 = vadd.f32 %v772, %v782
          %v812 = vadd.f32 %v773, %v782
          %v813 = vadd.f32 %v774, %v782
          %v814 = vadd.f32 %v775, %v782
          %v815 = vadd.f32 %v776, %v782
          %v816 = vxor.u32 %v784, 2147483648
          %v817 = vxor.u32 %v785, 2147483648
          %v818 = vxor.u32 %v786, 2147483648
          %v819 = vxor.u32 %v787, 2147483648
          %v820 = vxor.u32 %v788, 2147483648
          %v821 = vxor.u32 %v789, 2147483648
          %v822 = vxor.u32 %v790, 2147483648
          %v823 = vxor.u32 %v791, 2147483648
          %v824 = vxor.u32 %v792, 2147483648
          %v825 = vxor.u32 %v793, 2147483648
          %v826 = vxor.u32 %v794, 2147483648
          %v827 = vxor.u32 %v795, 2147483648
          %v828 = vxor.u32 %v796, 2147483648
          %v829 = vxor.u32 %v797, 2147483648
          %v830 = vxor.u32 %v798, 2147483648
          %v831 = vxor.u32 %v799, 2147483648
          %v832 = vxor.u32 %v800, 2147483648
          %v833 = vxor.u32 %v801, 2147483648
          %v834 = vxor.u32 %v802, 2147483648
          %v835 = vxor.u32 %v803, 2147483648
          %v836 = vxor.u32 %v804, 2147483648
          %v837 = vxor.u32 %v805, 2147483648
          %v838 = vxor.u32 %v806, 2147483648
          %v839 = vxor.u32 %v807, 2147483648
          %v840 = vxor.u32 %v808, 2147483648
          %v841 = vxor.u32 %v809, 2147483648
          %v842 = vxor.u32 %v810, 2147483648
          %v843 = vxor.u32 %v811, 2147483648
          %v844 = vxor.u32 %v812, 2147483648
          %v845 = vxor.u32 %v813, 2147483648
          %v846 = vxor.u32 %v814, 2147483648
          %v847 = vxor.u32 %v815, 2147483648
          %v848 = vmul.f32 %v816, 1.442695
          %v849 = vpow.pop %v848
          %v850 = vmul.f32 %v817, 1.442695
          %v851 = vpow.pop %v850
          %v852 = vmul.f32 %v818, 1.442695
          %v853 = vpow.pop %v852
          %v854 = vmul.f32 %v819, 1.442695
          %v855 = vpow.pop %v854
          %v856 = vmul.f32 %v820, 1.442695
          %v857 = vpow.pop %v856
          %v858 = vmul.f32 %v821, 1.442695
          %v859 = vpow.pop %v858
          %v860 = vmul.f32 %v822, 1.442695
          %v861 = vpow.pop %v860
          %v862 = vmul.f32 %v823, 1.442695
          %v863 = vpow.pop %v862
          %v864 = vmul.f32 %v824, 1.442695
          %v865 = vpow.pop %v864
          %v866 = vmul.f32 %v825, 1.442695
          %v867 = vpow.pop %v866
          %v868 = vmul.f32 %v826, 1.442695
          %v869 = vpow.pop %v868
          %v870 = vmul.f32 %v827, 1.442695
          %v871 = vpow.pop %v870
          %v872 = vmul.f32 %v828, 1.442695
          %v873 = vpow.pop %v872
          %v874 = vmul.f32 %v829, 1.442695
          %v875 = vpow.pop %v874
          %v876 = vmul.f32 %v830, 1.442695
          %v877 = vpow.pop %v876
          %v878 = vmul.f32 %v831, 1.442695
          %v879 = vpow.pop %v878
          %v880 = vmul.f32 %v832, 1.442695
          %v881 = vpow.pop %v880
          %v882 = vmul.f32 %v833, 1.442695
          %v883 = vpow.pop %v882
          %v884 = vmul.f32 %v834, 1.442695
          %v885 = vpow.pop %v884
          %v886 = vmul.f32 %v835, 1.442695
          %v887 = vpow.pop %v886
          %v888 = vmul.f32 %v836, 1.442695
          %v889 = vpow.pop %v888
          %v890 = vmul.f32 %v837, 1.442695
          %v891 = vpow.pop %v890
          %v892 = vmul.f32 %v838, 1.442695
          %v893 = vpow.pop %v892
          %v894 = vmul.f32 %v839, 1.442695
          %v895 = vpow.pop %v894
          %v896 = vmul.f32 %v840, 1.442695
          %v897 = vpow.pop %v896
          %v898 = vmul.f32 %v841, 1.442695
          %v899 = vpow.pop %v898
          %v900 = vmul.f32 %v842, 1.442695
          %v901 = vpow.pop %v900
          %v902 = vmul.f32 %v843, 1.442695
          %v903 = vpow.pop %v902
          %v904 = vmul.f32 %v844, 1.442695
          %v905 = vpow.pop %v904
          %v906 = vmul.f32 %v845, 1.442695
          %v907 = vpow.pop %v906
          %v908 = vmul.f32 %v846, 1.442695
          %v909 = vpow.pop %v908
          %v910 = vmul.f32 %v847, 1.442695
          %v911 = vpow.pop %v910
          %v912 = vadd.f32 %v849, 1.0
          %v913 = vadd.f32 %v851, 1.0
          %v914 = vadd.f32 %v853, 1.0
          %v915 = vadd.f32 %v855, 1.0
          %v916 = vadd.f32 %v857, 1.0
          %v917 = vadd.f32 %v859, 1.0
          %v918 = vadd.f32 %v861, 1.0
          %v919 = vadd.f32 %v863, 1.0
          %v920 = vadd.f32 %v865, 1.0
          %v921 = vadd.f32 %v867, 1.0
          %v922 = vadd.f32 %v869, 1.0
          %v923 = vadd.f32 %v871, 1.0
          %v924 = vadd.f32 %v873, 1.0
          %v925 = vadd.f32 %v875, 1.0
          %v926 = vadd.f32 %v877, 1.0
          %v927 = vadd.f32 %v879, 1.0
          %v928 = vadd.f32 %v881, 1.0
          %v929 = vadd.f32 %v883, 1.0
          %v930 = vadd.f32 %v885, 1.0
          %v931 = vadd.f32 %v887, 1.0
          %v932 = vadd.f32 %v889, 1.0
          %v933 = vadd.f32 %v891, 1.0
          %v934 = vadd.f32 %v893, 1.0
          %v935 = vadd.f32 %v895, 1.0
          %v936 = vadd.f32 %v897, 1.0
          %v937 = vadd.f32 %v899, 1.0
          %v938 = vadd.f32 %v901, 1.0
          %v939 = vadd.f32 %v903, 1.0
          %v940 = vadd.f32 %v905, 1.0
          %v941 = vadd.f32 %v907, 1.0
          %v942 = vadd.f32 %v909, 1.0
          %v943 = vadd.f32 %v911, 1.0
          %v944 = vrcp.pop %v912
          %v945 = vmul.f32 1.0, %v944
          %v946 = vrcp.pop %v913
          %v947 = vmul.f32 1.0, %v946
          %v948 = vrcp.pop %v914
          %v949 = vmul.f32 1.0, %v948
          %v950 = vrcp.pop %v915
          %v951 = vmul.f32 1.0, %v950
          %v952 = vrcp.pop %v916
          %v953 = vmul.f32 1.0, %v952
          %v954 = vrcp.pop %v917
          %v955 = vmul.f32 1.0, %v954
          %v956 = vrcp.pop %v918
          %v957 = vmul.f32 1.0, %v956
          %v958 = vrcp.pop %v919
          %v959 = vmul.f32 1.0, %v958
          %v960 = vrcp.pop %v920
          %v961 = vmul.f32 1.0, %v960
          %v962 = vrcp.pop %v921
          %v963 = vmul.f32 1.0, %v962
          %v964 = vrcp.pop %v922
          %v965 = vmul.f32 1.0, %v964
          %v966 = vrcp.pop %v923
          %v967 = vmul.f32 1.0, %v966
          %v968 = vrcp.pop %v924
          %v969 = vmul.f32 1.0, %v968
          %v970 = vrcp.pop %v925
          %v971 = vmul.f32 1.0, %v970
          %v972 = vrcp.pop %v926
          %v973 = vmul.f32 1.0, %v972
          %v974 = vrcp.pop %v927
          %v975 = vmul.f32 1.0, %v974
          %v976 = vrcp.pop %v928
          %v977 = vmul.f32 1.0, %v976
          %v978 = vrcp.pop %v929
          %v979 = vmul.f32 1.0, %v978
          %v980 = vrcp.pop %v930
          %v981 = vmul.f32 1.0, %v980
          %v982 = vrcp.pop %v931
          %v983 = vmul.f32 1.0, %v982
          %v984 = vrcp.pop %v932
          %v985 = vmul.f32 1.0, %v984
          %v986 = vrcp.pop %v933
          %v987 = vmul.f32 1.0, %v986
          %v988 = vrcp.pop %v934
          %v989 = vmul.f32 1.0, %v988
          %v990 = vrcp.pop %v935
          %v991 = vmul.f32 1.0, %v990
          %v992 = vrcp.pop %v936
          %v993 = vmul.f32 1.0, %v992
          %v994 = vrcp.pop %v937
          %v995 = vmul.f32 1.0, %v994
          %v996 = vrcp.pop %v938
          %v997 = vmul.f32 1.0, %v996
          %v998 = vrcp.pop %v939
          %v999 = vmul.f32 1.0, %v998
          %v1000 = vrcp.pop %v940
          %v1001 = vmul.f32 1.0, %v1000
          %v1002 = vrcp.pop %v941
          %v1003 = vmul.f32 1.0, %v1002
          %v1004 = vrcp.pop %v942
          %v1005 = vmul.f32 1.0, %v1004
          %v1006 = vrcp.pop %v943
          %v1007 = vmul.f32 1.0, %v1006
          %v1008 = vmul.f32 %v784, %v945
          %v1009 = vmul.f32 %v785, %v947
          %v1010 = vmul.f32 %v786, %v949
          %v1011 = vmul.f32 %v787, %v951
          %v1012 = vmul.f32 %v788, %v953
          %v1013 = vmul.f32 %v789, %v955
          %v1014 = vmul.f32 %v790, %v957
          %v1015 = vmul.f32 %v791, %v959
          %v1016 = vmul.f32 %v792, %v961
          %v1017 = vmul.f32 %v793, %v963
          %v1018 = vmul.f32 %v794, %v965
          %v1019 = vmul.f32 %v795, %v967
          %v1020 = vmul.f32 %v796, %v969
          %v1021 = vmul.f32 %v797, %v971
          %v1022 = vmul.f32 %v798, %v973
          %v1023 = vmul.f32 %v799, %v975
          %v1024 = vmul.f32 %v800, %v977
          %v1025 = vmul.f32 %v801, %v979
          %v1026 = vmul.f32 %v802, %v981
          %v1027 = vmul.f32 %v803, %v983
          %v1028 = vmul.f32 %v804, %v985
          %v1029 = vmul.f32 %v805, %v987
          %v1030 = vmul.f32 %v806, %v989
          %v1031 = vmul.f32 %v807, %v991
          %v1032 = vmul.f32 %v808, %v993
          %v1033 = vmul.f32 %v809, %v995
          %v1034 = vmul.f32 %v810, %v997
          %v1035 = vmul.f32 %v811, %v999
          %v1036 = vmul.f32 %v812, %v1001
          %v1037 = vmul.f32 %v813, %v1003
          %v1038 = vmul.f32 %v814, %v1005
          %v1039 = vmul.f32 %v815, %v1007
          %v1040 = vpack.c.bf16 %v1009, %v1008
          %v1041 = vpack.c.bf16 %v1011, %v1010
          %v1042 = vpack.c.bf16 %v1013, %v1012
          %v1043 = vpack.c.bf16 %v1015, %v1014
          %v1044 = vpack.c.bf16 %v1017, %v1016
          %v1045 = vpack.c.bf16 %v1019, %v1018
          %v1046 = vpack.c.bf16 %v1021, %v1020
          %v1047 = vpack.c.bf16 %v1023, %v1022
          %v1048 = vpack.c.bf16 %v1025, %v1024
          %v1049 = vpack.c.bf16 %v1027, %v1026
          %v1050 = vpack.c.bf16 %v1029, %v1028
          %v1051 = vpack.c.bf16 %v1031, %v1030
          %v1052 = vpack.c.bf16 %v1033, %v1032
          %v1053 = vpack.c.bf16 %v1035, %v1034
          %v1054 = vpack.c.bf16 %v1037, %v1036
          %v1055 = vpack.c.bf16 %v1039, %v1038
          %v1072 = vunpack.c.l.b16 %v1040
          %v1073 = vunpack.c.h.b16 %v1040
          %v1074 = vunpack.c.l.b16 %v1041
          %v1075 = vunpack.c.h.b16 %v1041
          %v1076 = vunpack.c.l.b16 %v1042
          %v1077 = vunpack.c.h.b16 %v1042
          %v1078 = vunpack.c.l.b16 %v1043
          %v1079 = vunpack.c.h.b16 %v1043
          %v1080 = vunpack.c.l.b16 %v1044
          %v1081 = vunpack.c.h.b16 %v1044
          %v1082 = vunpack.c.l.b16 %v1045
          %v1083 = vunpack.c.h.b16 %v1045
          %v1084 = vunpack.c.l.b16 %v1046
          %v1085 = vunpack.c.h.b16 %v1046
          %v1086 = vunpack.c.l.b16 %v1047
          %v1087 = vunpack.c.h.b16 %v1047
          %v1088 = vunpack.c.l.b16 %v1048
          %v1089 = vunpack.c.h.b16 %v1048
          %v1090 = vunpack.c.l.b16 %v1049
          %v1091 = vunpack.c.h.b16 %v1049
          %v1092 = vunpack.c.l.b16 %v1050
          %v1093 = vunpack.c.h.b16 %v1050
          %v1094 = vunpack.c.l.b16 %v1051
          %v1095 = vunpack.c.h.b16 %v1051
          %v1096 = vunpack.c.l.b16 %v1052
          %v1097 = vunpack.c.h.b16 %v1052
          %v1098 = vunpack.c.l.b16 %v1053
          %v1099 = vunpack.c.h.b16 %v1053
          %v1100 = vunpack.c.l.b16 %v1054
          %v1101 = vunpack.c.h.b16 %v1054
          %v1102 = vunpack.c.l.b16 %v1055
          %v1103 = vunpack.c.h.b16 %v1055
          %v1104 = vpack.c.b16 %v1072, %v1072
          %v1105 = vpack.c.b16 %v1073, %v1073
          %v1106 = vpack.c.b16 %v1074, %v1074
          %v1107 = vpack.c.b16 %v1075, %v1075
          %v1108 = vpack.c.b16 %v1076, %v1076
          %v1109 = vpack.c.b16 %v1077, %v1077
          %v1110 = vpack.c.b16 %v1078, %v1078
          %v1111 = vpack.c.b16 %v1079, %v1079
          %v1112 = vpack.c.b16 %v1080, %v1080
          %v1113 = vpack.c.b16 %v1081, %v1081
          %v1114 = vpack.c.b16 %v1082, %v1082
          %v1115 = vpack.c.b16 %v1083, %v1083
          %v1116 = vpack.c.b16 %v1084, %v1084
          %v1117 = vpack.c.b16 %v1085, %v1085
          %v1118 = vpack.c.b16 %v1086, %v1086
          %v1119 = vpack.c.b16 %v1087, %v1087
          %v1120 = vpack.c.b16 %v1088, %v1088
          %v1121 = vpack.c.b16 %v1089, %v1089
          %v1122 = vpack.c.b16 %v1090, %v1090
          %v1123 = vpack.c.b16 %v1091, %v1091
          %v1124 = vpack.c.b16 %v1092, %v1092
          %v1125 = vpack.c.b16 %v1093, %v1093
          %v1126 = vpack.c.b16 %v1094, %v1094
          %v1127 = vpack.c.b16 %v1095, %v1095
          %v1128 = vpack.c.b16 %v1096, %v1096
          %v1129 = vpack.c.b16 %v1097, %v1097
          %v1130 = vpack.c.b16 %v1098, %v1098
          %v1131 = vpack.c.b16 %v1099, %v1099
          %v1132 = vpack.c.b16 %v1100, %v1100
          %v1133 = vpack.c.b16 %v1101, %v1101
          %v1134 = vpack.c.b16 %v1102, %v1102
          %v1135 = vpack.c.b16 %v1103, %v1103
          %1168 = vst [vmem:[%s249] sm:$0xf] %v1104
          %1169 = vst [vmem:[%s249 + $0x4] sm:$0xf] %v1105
          %1170 = vst [vmem:[%s249 + $0x8] sm:$0xf] %v1106
          %1171 = vst [vmem:[%s249 + $0xc] sm:$0xf] %v1107
          %1172 = vst [vmem:[%s249 + $0x10] sm:$0xf] %v1108
          %1173 = vst [vmem:[%s249 + $0x14] sm:$0xf] %v1109
          %1174 = vst [vmem:[%s249 + $0x18] sm:$0xf] %v1110
          %1175 = vst [vmem:[%s249 + $0x1c] sm:$0xf] %v1111
          %1176 = vst [vmem:[%s249 + $0x20] sm:$0xf] %v1112
          %1177 = vst [vmem:[%s249 + $0x24] sm:$0xf] %v1113
          %1178 = vst [vmem:[%s249 + $0x28] sm:$0xf] %v1114
          %1179 = vst [vmem:[%s249 + $0x2c] sm:$0xf] %v1115
          %1180 = vst [vmem:[%s249 + $0x30] sm:$0xf] %v1116
          %1181 = vst [vmem:[%s249 + $0x34] sm:$0xf] %v1117
          %1182 = vst [vmem:[%s249 + $0x38] sm:$0xf] %v1118
          %1183 = vst [vmem:[%s249 + $0x3c] sm:$0xf] %v1119
          %1184 = vst [vmem:[%s249 + $0x40] sm:$0xf] %v1120
          %1185 = vst [vmem:[%s249 + $0x44] sm:$0xf] %v1121
          %1186 = vst [vmem:[%s249 + $0x48] sm:$0xf] %v1122
          %1187 = vst [vmem:[%s249 + $0x4c] sm:$0xf] %v1123
          %1188 = vst [vmem:[%s249 + $0x50] sm:$0xf] %v1124
          %1189 = vst [vmem:[%s249 + $0x54] sm:$0xf] %v1125
          %1190 = vst [vmem:[%s249 + $0x58] sm:$0xf] %v1126
          %1191 = vst [vmem:[%s249 + $0x5c] sm:$0xf] %v1127
          %1192 = vst [vmem:[%s249 + $0x60] sm:$0xf] %v1128
          %1193 = vst [vmem:[%s249 + $0x64] sm:$0xf] %v1129
          %1194 = vst [vmem:[%s249 + $0x68] sm:$0xf] %v1130
          %1195 = vst [vmem:[%s249 + $0x6c] sm:$0xf] %v1131
          %1196 = vst [vmem:[%s249 + $0x70] sm:$0xf] %v1132
          %1197 = vst [vmem:[%s249 + $0x74] sm:$0xf] %v1133
          %1198 = vst [vmem:[%s249 + $0x78] sm:$0xf] %v1134
          %1199 = vst [vmem:[%s249 + $0x7c] sm:$0xf] %v1135
        $region48: #{tpu_custom_call.1} parent=31 // pred_fallthru
          _
        %s1200 = sand.u32 %s132, 1
        %s1201 = scalar_lea.sflag [#allocation5], %s1200
        %s1202 = sand.u32 %s132, 1
        %s1203 = smul.addr %s1202, 128
        %s1204 = scalar_lea.vmem [#allocation8], %s1203
        // Predicated region
        $region49: #{tpu_custom_call.1} parent=31 // pred_check
          %p1205 = pneg %p142
        $region50: #{tpu_custom_call.1} parent=31 // pred_check_branch
          %1207 = sbr.rel (%p1205) target = $region52
        $region51: #{tpu_custom_call.1} parent=31 // pred_region
          %s1208 = smul.u32 32, %s26
          %s1210 = ssub.s32 2048, 2048
          %1211 = vsyncadd %s1201, %s1210
          %s1212 = sadd.s32 %s27, %s1208
          %s1213 = smul.addr %s1212, 64
          %s1214 = scalar_lea.hbm %s3, %s1213
          %s1215 = sshll.u32 %s1204, 4
          %s1216 = int_to_ptr.vmem [resolvable:$true] %s1215
          %1221 = dma.vmem_to_hbm [thread:$0]  %s1216, 2048, %s1214, %s1201, 64, 64, 4
        $region52: #{tpu_custom_call.1} parent=31 // pred_fallthru
          _
      $region32: #{tpu_custom_call.1} parent=5 // pred_fallthru
        _
      %p1222 = scmp.le.s32.totalorder 2, %s16
      // Predicated region
      $region53: #{tpu_custom_call.1} parent=5 // pred_check
        %p1223 = pneg %p1222
      $region54: #{tpu_custom_call.1} parent=5 // pred_check_branch
        %1225 = sbr.rel (%p1223) target = $region56
      $region55: #{tpu_custom_call.1} parent=5 // pred_region
        %s1226 = ssub.s32 %s16, 2
        // Predicated region
        $region57: #{tpu_custom_call.1} parent=55 // pred_check
          %p1227 = pneg %p148
        $region58: #{tpu_custom_call.1} parent=55 // pred_check_branch
          %1229 = sbr.rel (%p1227) target = $region60
        $region59: #{tpu_custom_call.1} parent=55 // pred_region
          %s1230 = sand.u32 %s133, 1
          %s1231 = scalar_lea.sflag [#allocation5], %s1230
          %s1232 = sand.u32 %s133, 1
          %s1233 = smul.addr %s1232, 128
          %s1234 = scalar_lea.vmem [#allocation8], %s1233
          %1235 = dma.done %s1231, 2048
        $region60: #{tpu_custom_call.1} parent=55 // pred_fallthru
          _
      $region56: #{tpu_custom_call.1} parent=5 // pred_fallthru
        _
    $region6: #{tpu_custom_call.1} parent=1 // loop_footer
      %s20 = sadd.s32 1, %s16
    $region7: #{tpu_custom_call.1} parent=1 // loop_footer_branch
      %15 = sbr.rel target = $region3
    $region8: #{tpu_custom_call.1} parent=1 // loop_exit
      _
    %1236 = vsyncpa [#allocation4], 1
    %s1237 = scalar_lea.sflag [#allocation4], 1
    %1238 = vsyncpa %s1237, 1
    %1239 = vsyncpa [#allocation7], 1
    %1240 = vsyncpa [#allocation5], 1
    %s1241 = scalar_lea.sflag [#allocation5], 1
    %1242 = vsyncpa %s1241, 1

</llo_original>
